<compile_context>
chip_gen: v7x
topology: tpu7x:2x2x1
jax: 0.10.0
libtpu: 0.0.40
codegen_flags: <defaults>
</compile_context>

<pallas_src>
import functools

import jax
import jax.numpy as jnp
from jax.experimental import pallas as pl
from jax.experimental.pallas import tpu as pltpu

# Plain Python floats/ints only — closing over jnp.float32(...) constants is
# what caused the previous "kernel captures constants [f32[]]" trace error.
_NEG_INF = -1e30          # exp(-1e30 - row_max) underflows to exactly 0
_LANE = 128               # TPU vreg lane width
_SUBLANE = 8              # TPU vreg sublane count


def _round_up(n, m):
    return ((n + m - 1) // m) * m


def _global_router_kernel(pooled_ref, w1_ref, b1_ref, w2_ref, b2_ref,
                          probs_ref, *, inv_temperature, top_k):
    # --- router MLP: Linear -> ReLU -> Linear (bf16 MXU, f32 accumulate) ----
    h = jnp.dot(pooled_ref[...], w1_ref[...],
                preferred_element_type=jnp.float32)          # (TB, H) f32
    h = jnp.maximum(h + b1_ref[...], 0.0)                    # ReLU, f32
    logits = jnp.dot(h.astype(jnp.bfloat16), w2_ref[...],
                     preferred_element_type=jnp.float32)     # (TB, Ep) f32
    logits = logits + b2_ref[...]           # pad-expert lanes carry -1e30 bias

    scaled = logits * inv_temperature       # Python float -> literal, no const

    # --- top-k mask: find the k-th largest value per row, keep >= kth -------
    # (iterative max-and-mask; exact ties keep all equal entries, matching
    #  `scaled >= kth` semantics rather than torch.topk's exactly-k behaviour)
    work = scaled
    for _ in range(top_k - 1):
        row_max = jnp.max(work, axis=-1, keepdims=True)
        work = jnp.where(work >= row_max, _NEG_INF, work)
    kth = jnp.max(work, axis=-1, keepdims=True)
    masked = jnp.where(scaled >= kth, scaled, _NEG_INF)

    # --- softmax over the lane-dense (padded-to-128) expert axis ------------
    m = jnp.max(masked, axis=-1, keepdims=True)
    e = jnp.exp(masked - m)
    denom = jnp.sum(e, axis=-1, keepdims=True)
    # EUP reciprocal (exact) keeps the divide off the VALU path.
    probs_ref[...] = e * pl.reciprocal(denom, approx=False)


def global_router_forward(x, w1_t, b1, w2_t, b2, *, temperature=1.0, top_k=2):
    """Eval-mode GlobalRouter forward.

    Args:
      x:    (B, S, H) activations; only token 0 (CLS) is routed.
      w1_t: (H, H) first Linear weight, pre-transposed to (in, out).
      b1:   (H,)   first Linear bias.
      w2_t: (H, E) second Linear weight, pre-transposed to (in, out).
      b2:   (E,)   second Linear bias.
    Returns:
      (cached_probs, probs) where cached_probs = probs[0]; probs is (B, E).
    """
    B, S, H = x.shape
    E = w2_t.shape[-1]
    top_k = int(min(top_k, E))

    # Only the CLS token is routed: slice *before* pallas_call so the kernel
    # never DMAs the (B, S, H) sequence (S x less activation traffic, and no
    # risk of a giant double-buffered block blowing VMEM on v7x's 64 MiB).
    pooled = x[:, 0, :].astype(jnp.float32)                        # (B, H)

    # Batch tile: multiple of 8 sublanes, at most 128 rows per grid step.
    TB = min(_LANE, _round_up(B, _SUBLANE))
    Bp = _round_up(B, TB)
    if Bp != B:
        pooled = jnp.pad(pooled, ((0, Bp - B), (0, 0)))

    # Lane-dense expert slab: pad E up to 128 lanes.  Pad columns get zero
    # weights and a -1e30 bias so top-k can never select them and softmax
    # maps them to exactly 0; they are sliced off in the wrapper.
    Ep = _round_up(max(E, _LANE), _LANE)
    w2_p = jnp.pad(w2_t, ((0, 0), (0, Ep - E)))
    b2_p = jnp.pad(b2.reshape(1, E).astype(jnp.float32),
                   ((0, 0), (0, Ep - E)), constant_values=_NEG_INF)

    # bf16 matmul operands (MXU-native on v5e/v6e/v7x), f32 accumulate and
    # f32 elementwise epilogue inside the kernel (v5e VPU/EUP have no bf16).
    pooled_bf = pooled.astype(jnp.bfloat16)
    w1_bf = w1_t.astype(jnp.bfloat16)
    w2_bf = w2_p.astype(jnp.bfloat16)
    b1_f = b1.reshape(1, H).astype(jnp.float32)

    kernel = functools.partial(_global_router_kernel,
                               inv_temperature=float(1.0 / temperature),
                               top_k=top_k)

    flops = 2 * Bp * H * (H + Ep)
    bytes_accessed = (pooled_bf.size * 2 + w1_bf.size * 2 + w2_bf.size * 2
                      + b1_f.size * 4 + b2_p.size * 4 + Bp * Ep * 4)
    cost = pl.CostEstimate(flops=flops, transcendentals=Bp * Ep,
                           bytes_accessed=bytes_accessed)

    probs_padded = pl.pallas_call(
        kernel,
        out_shape=jax.ShapeDtypeStruct((Bp, Ep), jnp.float32),
        grid=(Bp // TB,),
        in_specs=[
            pl.BlockSpec((TB, H), lambda i: (i, 0)),   # pooled, batch-tiled
            pl.BlockSpec((H, H),  lambda i: (0, 0)),   # W1^T, VMEM-resident
            pl.BlockSpec((1, H),  lambda i: (0, 0)),   # b1
            pl.BlockSpec((H, Ep), lambda i: (0, 0)),   # W2^T (padded experts)
            pl.BlockSpec((1, Ep), lambda i: (0, 0)),   # b2   (padded experts)
        ],
        out_specs=pl.BlockSpec((TB, Ep), lambda i: (i, 0)),
        compiler_params=pltpu.CompilerParams(
            dimension_semantics=("parallel",),          # megacore on v7x
            vmem_limit_bytes=32 * 1024 * 1024),
        cost_estimate=cost,
    )(pooled_bf, w1_bf, b1_f, w2_bf, b2_p)

    probs = probs_padded[:B, :E]
    return probs[0], probs


def _reference_forward(x, w1_t, b1, w2_t, b2, temperature, top_k):
    """Pure-JAX reference mirroring the wrapper's bf16 matmul operands."""
    f = lambda a: a.astype(jnp.bfloat16).astype(jnp.float32)
    pooled = f(x[:, 0])
    h = jnp.maximum(pooled @ f(w1_t) + b1, 0.0)
    logits = f(h) @ f(w2_t) + b2
    scaled = logits / temperature
    kth = jnp.sort(scaled, axis=-1)[:, -top_k][:, None]
    masked = jnp.where(scaled >= kth, scaled, -jnp.inf)
    return jax.nn.softmax(masked, axis=-1)


if __name__ == "__main__":
    # Small, deterministic configuration.
    B, S, H = 2, 8, 32          # batch, seq, hidden_size
    E = 4                        # num_loras
    temperature = 1.0
    top_k = 2

    key = jax.random.PRNGKey(0)
    kx, k1, k2, k3, k4 = jax.random.split(key, 5)

    x = jax.random.normal(kx, (B, S, H), dtype=jnp.float32)

    # PyTorch nn.Linear default init: U(-1/sqrt(fan_in), 1/sqrt(fan_in)).
    bound = 1.0 / (H ** 0.5)
    w1_t = jax.random.uniform(k1, (H, H), jnp.float32, -bound, bound)
    b1 = jax.random.uniform(k2, (H,), jnp.float32, -bound, bound)
    w2_t = jax.random.uniform(k3, (H, E), jnp.float32, -bound, bound)
    b2 = jax.random.uniform(k4, (E,), jnp.float32, -bound, bound)

    cached_probs, probs = global_router_forward(
        x, w1_t, b1, w2_t, b2, temperature=temperature, top_k=top_k)
    probs = jax.block_until_ready(probs)
    cached_probs = jax.block_until_ready(cached_probs)

    # Sanity check against a pure-JAX reference.
    ref = _reference_forward(x, w1_t, b1, w2_t, b2, temperature, top_k)
    assert probs.shape == (B, E)
    assert cached_probs.shape == (E,)
    assert bool(jnp.allclose(probs, ref, rtol=5e-3, atol=1e-3)), (probs, ref)
    assert bool(jnp.allclose(jnp.sum(probs, axis=-1), 1.0, atol=1e-3))

    print("KERNEL_OK")
</pallas_src>

<mosaic_0001>
module attributes {stable_mosaic.version = 11 : i64} {
  func.func @_global_router_kernel(%arg0: i32, %arg1: memref<8x32xbf16, #tpu.memory_space<vmem>>, %arg2: memref<32x32xbf16, #tpu.memory_space<vmem>>, %arg3: memref<1x32xf32, #tpu.memory_space<vmem>>, %arg4: memref<32x128xbf16, #tpu.memory_space<vmem>>, %arg5: memref<1x128xf32, #tpu.memory_space<vmem>>, %arg6: memref<8x128xf32, #tpu.memory_space<vmem>>) attributes {dimension_semantics = [#tpu.dimension_semantics<parallel>], iteration_bounds = array<i64: 1>, scalar_prefetch = 0 : i64, scratch_operands = 0 : i64, tpu.core_type = #tpu.core_type<tc>, window_params = [{transform_indices = @transform_0, window_bounds = array<i64: 8, 32>}, {pipeline_mode = #tpu.pipeline_mode<synchronous>, transform_indices = @transform_1, window_bounds = array<i64: 32, 32>}, {pipeline_mode = #tpu.pipeline_mode<synchronous>, transform_indices = @transform_2, window_bounds = array<i64: 1, 32>}, {pipeline_mode = #tpu.pipeline_mode<synchronous>, transform_indices = @transform_3, window_bounds = array<i64: 32, 128>}, {pipeline_mode = #tpu.pipeline_mode<synchronous>, transform_indices = @transform_4, window_bounds = array<i64: 1, 128>}, {transform_indices = @transform_5, window_bounds = array<i64: 8, 128>}]} {
    %c0 = arith.constant 0 : index
    %c0_0 = arith.constant 0 : index
    %0 = vector.load %arg1[%c0, %c0_0] : memref<8x32xbf16, #tpu.memory_space<vmem>>, vector<8x32xbf16>
    %c0_1 = arith.constant 0 : index
    %c0_2 = arith.constant 0 : index
    %1 = vector.load %arg2[%c0_1, %c0_2] : memref<32x32xbf16, #tpu.memory_space<vmem>>, vector<32x32xbf16>
    %cst = arith.constant dense<0.000000e+00> : vector<8x32xf32>
    %2 = tpu.matmul %0, %1, %cst {dimension_numbers = #tpu.dot_dimension_numbers<[1], [0], [0], [1], [0, 0, 1, 1], [], []>} : vector<8x32xbf16>, vector<32x32xbf16>, vector<8x32xf32> -> vector<8x32xf32>
    %c0_3 = arith.constant 0 : index
    %c0_4 = arith.constant 0 : index
    %3 = vector.load %arg3[%c0_3, %c0_4] : memref<1x32xf32, #tpu.memory_space<vmem>>, vector<1x32xf32>
    %4 = vector.broadcast %3 : vector<1x32xf32> to vector<8x32xf32>
    %5 = arith.addf %2, %4 : vector<8x32xf32>
    %cst_5 = arith.constant 0.000000e+00 : f32
    %6 = vector.broadcast %cst_5 : f32 to vector<8x32xf32>
    %7 = arith.maximumf %5, %6 : vector<8x32xf32>
    %8 = arith.truncf %7 : vector<8x32xf32> to vector<8x32xbf16>
    %c0_6 = arith.constant 0 : index
    %c0_7 = arith.constant 0 : index
    %9 = vector.load %arg4[%c0_6, %c0_7] : memref<32x128xbf16, #tpu.memory_space<vmem>>, vector<32x128xbf16>
    %cst_8 = arith.constant dense<0.000000e+00> : vector<8x128xf32>
    %10 = tpu.matmul %8, %9, %cst_8 {dimension_numbers = #tpu.dot_dimension_numbers<[1], [0], [0], [1], [0, 0, 1, 1], [], []>} : vector<8x32xbf16>, vector<32x128xbf16>, vector<8x128xf32> -> vector<8x128xf32>
    %c0_9 = arith.constant 0 : index
    %c0_10 = arith.constant 0 : index
    %11 = vector.load %arg5[%c0_9, %c0_10] : memref<1x128xf32, #tpu.memory_space<vmem>>, vector<1x128xf32>
    %12 = vector.broadcast %11 : vector<1x128xf32> to vector<8x128xf32>
    %13 = arith.addf %10, %12 : vector<8x128xf32>
    %cst_11 = arith.constant 1.000000e+00 : f32
    %14 = vector.broadcast %cst_11 : f32 to vector<8x128xf32>
    %15 = arith.mulf %13, %14 : vector<8x128xf32>
    %cst_12 = arith.constant dense<0xFF800000> : vector<8xf32>
    %16 = vector.multi_reduction <maximumf>, %15, %cst_12 [1] : vector<8x128xf32> to vector<8xf32>
    %17 = vector.shape_cast %16 : vector<8xf32> to vector<8x1xf32>
    %18 = vector.broadcast %17 : vector<8x1xf32> to vector<8x128xf32>
    %19 = arith.cmpf oge, %15, %18 : vector<8x128xf32>
    %cst_13 = arith.constant -1.000000e+30 : f32
    %20 = vector.broadcast %cst_13 : f32 to vector<8x128xf32>
    %21 = arith.select %19, %20, %15 : vector<8x128xi1>, vector<8x128xf32>
    %cst_14 = arith.constant dense<0xFF800000> : vector<8xf32>
    %22 = vector.multi_reduction <maximumf>, %21, %cst_14 [1] : vector<8x128xf32> to vector<8xf32>
    %23 = vector.shape_cast %22 : vector<8xf32> to vector<8x1xf32>
    %24 = vector.broadcast %23 : vector<8x1xf32> to vector<8x128xf32>
    %25 = arith.cmpf oge, %15, %24 : vector<8x128xf32>
    %cst_15 = arith.constant -1.000000e+30 : f32
    %26 = vector.broadcast %cst_15 : f32 to vector<8x128xf32>
    %27 = arith.select %25, %15, %26 : vector<8x128xi1>, vector<8x128xf32>
    %cst_16 = arith.constant dense<0xFF800000> : vector<8xf32>
    %28 = vector.multi_reduction <maximumf>, %27, %cst_16 [1] : vector<8x128xf32> to vector<8xf32>
    %29 = vector.shape_cast %28 : vector<8xf32> to vector<8x1xf32>
    %30 = vector.broadcast %29 : vector<8x1xf32> to vector<8x128xf32>
    %31 = arith.subf %27, %30 : vector<8x128xf32>
    %32 = math.exp %31 : vector<8x128xf32>
    %cst_17 = arith.constant dense<0.000000e+00> : vector<8xf32>
    %33 = vector.multi_reduction <add>, %32, %cst_17 [1] : vector<8x128xf32> to vector<8xf32>
    %34 = vector.shape_cast %33 : vector<8xf32> to vector<8x1xf32>
    %35 = tpu.reciprocal %34 : vector<8x1xf32> -> vector<8x1xf32>
    %36 = vector.broadcast %35 : vector<8x1xf32> to vector<8x128xf32>
    %37 = arith.mulf %32, %36 : vector<8x128xf32>
    %c0_18 = arith.constant 0 : index
    %c0_19 = arith.constant 0 : index
    %38 = vector.load %arg6[%c0_18, %c0_19] : memref<8x128xf32, #tpu.memory_space<vmem>>, vector<8x128xf32>
    tpu.vector_store %arg6[%c0_18, %c0_19], %37 {strides = array<i32>} : memref<8x128xf32, #tpu.memory_space<vmem>>, vector<8x128xf32>,
    return
  }
  func.func @transform_0(%arg0: i32) -> (i32, i32) {
    %c0_i32 = arith.constant 0 : i32
    %c0_i32_0 = arith.constant 0 : i32
    return %arg0, %c0_i32 : i32, i32
  }
  func.func @transform_1(%arg0: i32) -> (i32, i32) {
    %c0_i32 = arith.constant 0 : i32
    %c0_i32_0 = arith.constant 0 : i32
    %c0_i32_1 = arith.constant 0 : i32
    return %c0_i32, %c0_i32_0 : i32, i32
  }
  func.func @transform_2(%arg0: i32) -> (i32, i32) {
    %c0_i32 = arith.constant 0 : i32
    %c0_i32_0 = arith.constant 0 : i32
    %c0_i32_1 = arith.constant 0 : i32
    return %c0_i32, %c0_i32_0 : i32, i32
  }
  func.func @transform_3(%arg0: i32) -> (i32, i32) {
    %c0_i32 = arith.constant 0 : i32
    %c0_i32_0 = arith.constant 0 : i32
    %c0_i32_1 = arith.constant 0 : i32
    return %c0_i32, %c0_i32_0 : i32, i32
  }
  func.func @transform_4(%arg0: i32) -> (i32, i32) {
    %c0_i32 = arith.constant 0 : i32
    %c0_i32_0 = arith.constant 0 : i32
    %c0_i32_1 = arith.constant 0 : i32
    return %c0_i32, %c0_i32_0 : i32, i32
  }
  func.func @transform_5(%arg0: i32) -> (i32, i32) {
    %c0_i32 = arith.constant 0 : i32
    %c0_i32_0 = arith.constant 0 : i32
    return %arg0, %c0_i32 : i32, i32
  }
}

</mosaic_0001>

<llo_original>
// kernel: tpu_custom_call.1
$region0: #{tpu_custom_call.1}
  #allocation0 [shape = 'u32[]', space=smem, size = 0x4, offset = 0x4, fixed_abs, tag = 'smem constant byte address 0x4 - core index']
  #allocation1 [shape = 'u32[144,128]{1,0:T(1,128)}', space=vmem, size = 0x12000, scoped, tag = 'internal scratch']
  %s0 = inlined_call_operand.hbm [shape: bf16[8,32], index: 0, kind: input, shape index: {}]
  %s1 = inlined_call_operand.hbm [shape: bf16[32,32], index: 1, kind: input, shape index: {}]
  %s2 = inlined_call_operand.vmem [shape: f32[1,32], index: 2, kind: input, shape index: {}]
  %s3 = inlined_call_operand.hbm [shape: bf16[32,128], index: 3, kind: input, shape index: {}]
  %s4 = inlined_call_operand.vmem [shape: f32[1,128], index: 4, kind: input, shape index: {}]
  %s5 = inlined_call_operand.hbm [shape: f32[8,128], index: 5, kind: output, shape index: {}]
  %s6 = sld [smem:[#allocation0]]
  $region42: #{tpu_custom_call.1} parent=0
    _
  %s8 = ssub.s32 1, %s6
  %s9 = scalar_select 0, %s8, %s6
  $region1: #{tpu_custom_call.1} parent=0
    #allocation2 [shape = 'u8[2048]{0}', space=vmem, size = 0x800, scoped, tag = 'input window, operand 0, single buffered']
    #allocation3 [shape = 's32[1]{0}', space=sflag, size = 0x4, scoped, tag = 'scoped memory for tpu_custom_call.1']
    #allocation4 [shape = 's32[1]{0}', space=sflag, size = 0x4, scoped, tag = 'scoped memory for tpu_custom_call.1']
    #allocation5 [shape = 'u8[8192]{0}', space=vmem, size = 0x2000, scoped, tag = 'input window, operand 1, single buffered']
    #allocation6 [shape = 's32[1]{0}', space=sflag, size = 0x4, scoped, tag = 'scoped memory for tpu_custom_call.1']
    #allocation7 [shape = 'u8[8192]{0}', space=vmem, size = 0x2000, scoped, tag = 'input window, operand 3, single buffered']
    #allocation8 [shape = 'u8[4096]{0}', space=vmem, size = 0x1000, scoped, tag = 'output window, operand 0, single buffered']
    %10 = vsyncpa [#allocation3], 0
    %11 = vsyncpa [#allocation6], 0
    %12 = vsyncpa [#allocation4], 0
    // Predicated region
    $region2: #{tpu_custom_call.1} parent=1 // pred_check
      _
    $region3: #{tpu_custom_call.1} parent=1 // pred_check_branch
      %14 = sbr.rel (0) target = $region5
    $region4: #{tpu_custom_call.1} parent=1 // pred_region
      %s16 = ssub.s32 64, 64
      %17 = vsyncadd [#allocation3], %s16
      %s19 = sshll.u32 [#allocation2], 4
      %s20 = int_to_ptr.vmem [resolvable:$true] %s19
      %22 = dma.hbm_to_vmem [thread:$0]  %s0, 64, %s20, [#allocation3]
    $region5: #{tpu_custom_call.1} parent=1 // pred_fallthru
      _
    // Predicated region
    $region6: #{tpu_custom_call.1} parent=1 // pred_check
      _
    $region7: #{tpu_custom_call.1} parent=1 // pred_check_branch
      %24 = sbr.rel (0) target = $region9
    $region8: #{tpu_custom_call.1} parent=1 // pred_region
      %s26 = ssub.s32 256, 256
      %27 = vsyncadd [#allocation6], %s26
      %s28 = sshll.u32 [#allocation5], 4
      %s29 = int_to_ptr.vmem [resolvable:$true] %s28
      %34 = dma.hbm_to_vmem [thread:$0]  %s1, 256, %s29, [#allocation6], 64, 64, 4
    $region9: #{tpu_custom_call.1} parent=1 // pred_fallthru
      _
    // Predicated region
    $region10: #{tpu_custom_call.1} parent=1 // pred_check
      _
    $region11: #{tpu_custom_call.1} parent=1 // pred_check_branch
      %36 = sbr.rel (0) target = $region13
    $region12: #{tpu_custom_call.1} parent=1 // pred_region
      _
    $region13: #{tpu_custom_call.1} parent=1 // pred_fallthru
      _
    // Predicated region
    $region14: #{tpu_custom_call.1} parent=1 // pred_check
      _
    $region15: #{tpu_custom_call.1} parent=1 // pred_check_branch
      %38 = sbr.rel (0) target = $region17
    $region16: #{tpu_custom_call.1} parent=1 // pred_region
      %s40 = ssub.s32 256, 256
      %41 = vsyncadd [#allocation6], %s40
      %s42 = sshll.u32 [#allocation7], 4
      %s43 = int_to_ptr.vmem [resolvable:$true] %s42
      %48 = dma.hbm_to_vmem [thread:$0]  %s3, 256, %s43, [#allocation6], 64, 64, 4
    $region17: #{tpu_custom_call.1} parent=1 // pred_fallthru
      _
    // Predicated region
    $region18: #{tpu_custom_call.1} parent=1 // pred_check
      _
    $region19: #{tpu_custom_call.1} parent=1 // pred_check_branch
      %50 = sbr.rel (0) target = $region21
    $region20: #{tpu_custom_call.1} parent=1 // pred_region
      _
    $region21: #{tpu_custom_call.1} parent=1 // pred_fallthru
      _
    // Predicated region
    $region22: #{tpu_custom_call.1} parent=1 // pred_check
      _
    $region23: #{tpu_custom_call.1} parent=1 // pred_check_branch
      %52 = sbr.rel (0) target = $region25
    $region24: #{tpu_custom_call.1} parent=1 // pred_region
      %53 = dma.done [#allocation3], 64
    $region25: #{tpu_custom_call.1} parent=1 // pred_fallthru
      _
    // Predicated region
    $region26: #{tpu_custom_call.1} parent=1 // pred_check
      _
    $region27: #{tpu_custom_call.1} parent=1 // pred_check_branch
      %55 = sbr.rel (0) target = $region29
    $region28: #{tpu_custom_call.1} parent=1 // pred_region
      %56 = dma.done [#allocation6], 256
    $region29: #{tpu_custom_call.1} parent=1 // pred_fallthru
      _
    // Predicated region
    $region30: #{tpu_custom_call.1} parent=1 // pred_check
      _
    $region31: #{tpu_custom_call.1} parent=1 // pred_check_branch
      %58 = sbr.rel (0) target = $region33
    $region32: #{tpu_custom_call.1} parent=1 // pred_region
      %59 = dma.done [#allocation6], 256
    $region33: #{tpu_custom_call.1} parent=1 // pred_fallthru
      _
    %v61 = vld [vmem:[#allocation2] sm:$0xf]
    %v62 = vld [vmem:[#allocation5] sm:$0xf]
    %v63 = vld [vmem:[#allocation5 + $0x4] sm:$0xf]
    %v64 = vld [vmem:[#allocation5 + $0x8] sm:$0xf]
    %v65 = vld [vmem:[#allocation5 + $0xc] sm:$0xf]
    %v66 = vld [vmem:[%s2] sm:$0x1]
    %v68 = vlaneseq
    %v69 = vshrl.u32 %v68, 7
    %v70 = vsub.s32 0, %v69
    %v71 = vrot.slane %v66, %v70
    %v77 = vunpack.c.l.b16 %v62
    %v78 = vunpack.c.l.b16 %v63
    %v79 = vunpack.c.l.b16 %v64
    %v80 = vunpack.c.l.b16 %v65
    %v81 = vpack.c.b16 %v78, %v77
    %v82 = vpack.c.b16 %v80, %v79
    %vm85 = vcmask 261120
    %v87 = vsel %vm85, %v61, 0
    %89 = vmatprep.subr.bf16.mxu0 0
    %90 = vmatpush1.bf16.msra.mxu0 %v81
    %91 = vmatprep.subr.bf16.mxu0 0
    %92 = vmatpush1.bf16.msra.mxu0 %v82
    %93 = vmatprep.subr.bf16.mxu0 0
    %94 = vmatpush1.bf16.msra.mxu0 0
    %95 = vmatprep.subr.bf16.mxu0 0
    %96 = vmatpush1.bf16.msra.mxu0 0
    %97 = vmatprep.subr.bf16.mxu0 0
    %98 = vmatpush1.bf16.msra.mxu0 0
    %99 = vmatprep.subr.bf16.mxu0 0
    %100 = vmatpush1.bf16.msra.mxu0 0
    %101 = vmatprep.subr.bf16.mxu0 0
    %102 = vmatpush1.bf16.msra.mxu0 0
    %103 = vmatprep.subr.bf16.mxu0 0
    %104 = vmatpush1.bf16.msra.mxu0 0
    %105 = vmatprep.subr.bf16.mxu0 0
    %106 = vmatpush1.bf16.msra.mxu0 0
    %107 = vmatprep.subr.bf16.mxu0 0
    %108 = vmatpush1.bf16.msra.mxu0 0
    %109 = vmatprep.subr.bf16.mxu0 0
    %110 = vmatpush1.bf16.msra.mxu0 0
    %111 = vmatprep.subr.bf16.mxu0 0
    %112 = vmatpush1.bf16.msra.mxu0 0
    %113 = vmatprep.subr.bf16.mxu0 0
    %114 = vmatpush1.bf16.msra.mxu0 0
    %115 = vmatprep.subr.bf16.mxu0 0
    %116 = vmatpush1.bf16.msra.mxu0 0
    %117 = vmatprep.subr.bf16.mxu0 0
    %118 = vmatpush1.bf16.msra.mxu0 0
    %119 = vmatprep.subr.bf16.mxu0 0
    %120 = vmatpush1.bf16.msra.mxu0 0
    %121 = vmatprep.mubr.bf16.mxu0 0
    %122 = vmatmul.mubr.bf16.gmra.mrb[0].mxu0 %v87
    %v123 = vpop.f32.mrb[0].mxu0
    %v124 = vadd.f32 %v71, %v123
    %v125 = vpop.f32.mrb[0].mxu0
    %v126 = vpop.f32.mrb[0].mxu0
    %v127 = vpop.f32.mrb[0].mxu0
    %128 = vdwg.mxu0
    %v129 = vmax.f32 %v124, 0.0
    %v130 = vpack.c.bf16 %v129, %v129
    %v131 = vld [vmem:[#allocation7] sm:$0xf]
    %v132 = vld [vmem:[#allocation7 + $0x4] sm:$0xf]
    %v133 = vld [vmem:[#allocation7 + $0x8] sm:$0xf]
    %v134 = vld [vmem:[#allocation7 + $0xc] sm:$0xf]
    %v135 = vld [vmem:[%s4] sm:$0x1]
    %v137 = vlaneseq
    %v138 = vshrl.u32 %v137, 7
    %v139 = vsub.s32 0, %v138
    %v140 = vrot.slane %v135, %v139
    %v146 = vunpack.c.l.b16 %v131
    %v147 = vunpack.c.l.b16 %v132
    %v148 = vunpack.c.l.b16 %v133
    %v149 = vunpack.c.l.b16 %v134
    %v150 = vpack.c.b16 %v147, %v146
    %v151 = vpack.c.b16 %v149, %v148
    %v155 = vsel %vm85, %v130, 0
    %157 = vmatprep.subr.bf16.mxu0 0
    %158 = vmatpush1.bf16.msra.mxu0 %v150
    %159 = vmatprep.subr.bf16.mxu0 0
    %160 = vmatpush1.bf16.msra.mxu0 %v151
    %161 = vmatprep.subr.bf16.mxu0 0
    %162 = vmatpush1.bf16.msra.mxu0 0
    %163 = vmatprep.subr.bf16.mxu0 0
    %164 = vmatpush1.bf16.msra.mxu0 0
    %165 = vmatprep.subr.bf16.mxu0 0
    %166 = vmatpush1.bf16.msra.mxu0 0
    %167 = vmatprep.subr.bf16.mxu0 0
    %168 = vmatpush1.bf16.msra.mxu0 0
    %169 = vmatprep.subr.bf16.mxu0 0
    %170 = vmatpush1.bf16.msra.mxu0 0
    %171 = vmatprep.subr.bf16.mxu0 0
    %172 = vmatpush1.bf16.msra.mxu0 0
    %173 = vmatprep.subr.bf16.mxu0 0
    %174 = vmatpush1.bf16.msra.mxu0 0
    %175 = vmatprep.subr.bf16.mxu0 0
    %176 = vmatpush1.bf16.msra.mxu0 0
    %177 = vmatprep.subr.bf16.mxu0 0
    %178 = vmatpush1.bf16.msra.mxu0 0
    %179 = vmatprep.subr.bf16.mxu0 0
    %180 = vmatpush1.bf16.msra.mxu0 0
    %181 = vmatprep.subr.bf16.mxu0 0
    %182 = vmatpush1.bf16.msra.mxu0 0
    %183 = vmatprep.subr.bf16.mxu0 0
    %184 = vmatpush1.bf16.msra.mxu0 0
    %185 = vmatprep.subr.bf16.mxu0 0
    %186 = vmatpush1.bf16.msra.mxu0 0
    %187 = vmatprep.subr.bf16.mxu0 0
    %188 = vmatpush1.bf16.msra.mxu0 0
    %189 = vmatprep.mubr.bf16.mxu0 0
    %190 = vmatmul.mubr.bf16.gmra.mrb[0].mxu0 %v155
    %v191 = vpop.f32.mrb[0].mxu0
    %v192 = vadd.f32 %v140, %v191
    %v193 = vpop.f32.mrb[0].mxu0
    %v194 = vpop.f32.mrb[0].mxu0
    %v195 = vpop.f32.mrb[0].mxu0
    %196 = vdwg.mxu0
    %197 = vmax.xlane.f32.xlu0 %v192
    %v198 = vpop.xlane.xlu0 %197
    %vm199 = vcmp.ge.f32.partialorder %v192, %v198
    %v200 = vsel %vm199, -1e+30, %v192
    %201 = vmax.xlane.f32.xlu0 %v200
    %v202 = vpop.xlane.xlu0 %201
    %vm203 = vcmp.ge.f32.partialorder %v192, %v202
    %v204 = vsel %vm203, %v192, -1e+30
    %205 = vmax.xlane.f32.xlu0 %v204
    %v206 = vpop.xlane.xlu0 %205
    %v207 = vsub.f32 %v204, %v206
    %v208 = vmul.f32 %v207, 1.442695
    %v209 = vpow.pop %v208
    %210 = vadd.xlane.f32.xlu0 %v209
    %v211 = vpop.xlane.xlu0 %210
    %v212 = vrcp.pop %v211
    %v213 = vmul.f32 %v209, %v212
    %214 = vst [vmem:[#allocation8] sm:$0xff] %v213
    // Predicated region
    $region34: #{tpu_custom_call.1} parent=1 // pred_check
      _
    $region35: #{tpu_custom_call.1} parent=1 // pred_check_branch
      %216 = sbr.rel (0) target = $region37
    $region36: #{tpu_custom_call.1} parent=1 // pred_region
      %s218 = ssub.s32 128, 128
      %219 = vsyncadd [#allocation4], %s218
      %s221 = sshll.u32 [#allocation8], 4
      %s222 = int_to_ptr.vmem [resolvable:$true] %s221
      %224 = dma.vmem_to_hbm [thread:$0]  %s222, 128, %s5, [#allocation4]
    $region37: #{tpu_custom_call.1} parent=1 // pred_fallthru
      _
    // Predicated region
    $region38: #{tpu_custom_call.1} parent=1 // pred_check
      _
    $region39: #{tpu_custom_call.1} parent=1 // pred_check_branch
      %226 = sbr.rel (0) target = $region41
    $region40: #{tpu_custom_call.1} parent=1 // pred_region
      %227 = dma.done [#allocation4], 128
    $region41: #{tpu_custom_call.1} parent=1 // pred_fallthru
      _
    %228 = vsyncpa [#allocation3], 1
    %229 = vsyncpa [#allocation6], 1
    %230 = vsyncpa [#allocation4], 1

</llo_original>
